<compile_context>
chip_gen: v5e
topology: v5e:2x2
jax: 0.10.0
libtpu: 0.0.40
codegen_flags: <defaults>
</compile_context>

<pallas_src>
import functools

import jax
import jax.numpy as jnp
from jax import lax
from jax.experimental import pallas as pl
from jax.experimental.pallas import tpu as pltpu

EPS = 1e-5
_SELECT_CHAIN_MAX_G = 32     # below this, broadcast scale/shift on the VPU


def _round_up(x, m):
    return ((x + m - 1) // m) * m


def _vmem_capacity_bytes():
    try:
        return int(pltpu.get_tpu_info().vmem_capacity_bytes)
    except Exception:
        return 64 << 20      # conservative fallback (v7x per-TC VMEM)


def _choose_tile_n(n, c_in, c_pad, vmem_cap):
    # Single tile for small N (block == full dims), otherwise the largest
    # lane-aligned tile whose double-buffered working set fits the generation's
    # VMEM with headroom.
    if n <= 1024:
        return _round_up(max(n, 8), 8)
    per_row = 2 * (c_in * 4 + 4 + c_pad * 4) + 10 * c_pad * 4
    budget = vmem_cap // 3
    for t in (2048, 1024, 512, 256):
        if t * per_row <= budget:
            return t
    return 256


def _vmem_limit_bytes(tile_n, c_in, c_pad, g, vmem_cap):
    streams = 2 * tile_n * (c_in * 4 + 4 + c_pad * 4)            # double-buffered x/batch/y
    resident = (c_in + c_pad) * c_pad * 4 + 8 * c_pad + 4 * g * (2 * c_pad + 4)
    interm = 10 * tile_n * c_pad * 4
    est = streams + resident + interm + (4 << 20)
    return int(min(vmem_cap * 3 // 4, max(2 * est, 32 << 20)))


# ---------------------------------------------------------------------------
# Pass A: linear1 + per-graph [sum(h), sum(h^2)]  (per core-parallel chunk)
# ---------------------------------------------------------------------------
def _stats_kernel(mm_dtype,
                  batch_row_ref, x_ref, w1_ref, b1_ref,
                  sum_h_ref, sum_hh_ref):
    i = pl.program_id(1)     # tile index within this chunk

    @pl.when(i == 0)
    def _():
        sum_h_ref[...] = jnp.zeros_like(sum_h_ref)
        sum_hh_ref[...] = jnp.zeros_like(sum_hh_ref)

    G = sum_h_ref.shape[0]
    tile_n = x_ref.shape[0]

    # linear1 on the MXU (bf16 operands when enabled, f32 accumulation).
    x = x_ref[...].astype(mm_dtype)
    h = jnp.dot(x, w1_ref[...], preferred_element_type=jnp.float32) + b1_ref[...]

    # One-hot built directly in [G, tile_n] orientation (VPU compare, no XLU
    # transpose).  Padded nodes carry batch id == G and never match.
    batch_row = batch_row_ref[...]                                  # [1, tile_n]
    gid = lax.broadcasted_iota(jnp.int32, (G, tile_n), 0)
    onehot_t = (gid == batch_row).astype(jnp.float32)               # [G, tile_n]
    # TODO(synk): for very large G (>~256) tile the G axis or use sorted-batch
    # segment offsets; the O(G*tile_n) one-hot becomes VALU/vreg bound.

    # Segment sums stay in f32 (bf16 E[h^2]-mean^2 is cancellation-prone); two
    # separate dot-accumulations avoid a [tile_n, 2C] lane-concat copy.
    sum_h_ref[...] += jnp.dot(onehot_t, h, preferred_element_type=jnp.float32)
    sum_hh_ref[...] += jnp.dot(onehot_t, h * h, preferred_element_type=jnp.float32)


# ---------------------------------------------------------------------------
# Pass B: recompute linear1 + GraphNorm (folded scale/shift) + relu + linear2
# ---------------------------------------------------------------------------
def _norm_kernel(num_graphs, mm_dtype, use_select_chain,
                 batch_col_ref, x_ref, ss_ref, w1_ref, b1_ref, w2_ref, b2_ref,
                 out_ref):
    G = num_graphs
    tile_n = x_ref.shape[0]
    C = w1_ref.shape[1]

    # Recompute h = x@W1 + b1 from x (no h HBM roundtrip; W1/b1 are resident).
    x = x_ref[...].astype(mm_dtype)
    h = jnp.dot(x, w1_ref[...], preferred_element_type=jnp.float32) + b1_ref[...]

    batch_col = batch_col_ref[...]                                  # [tile_n, 1]
    ss = ss_ref[...]                                                # [G, 2C] f32
    if use_select_chain:
        # Small G: unrolled VPU select chain -> MXU stays free for linear1/2.
        sb = jnp.zeros((tile_n, 2 * C), jnp.float32)
        for g in range(G):
            sb = jnp.where(batch_col == g, ss[g:g + 1, :], sb)
    else:
        gid = lax.broadcasted_iota(jnp.int32, (tile_n, G), 1)
        onehot = (batch_col == gid).astype(jnp.float32)             # [tile_n, G]
        sb = jnp.dot(onehot, ss, preferred_element_type=jnp.float32)

    scale_b = sb[:, :C]
    shift_b = sb[:, C:]

    # GraphNorm as multiply-add only, then relu.
    hn = jnp.maximum(h * scale_b + shift_b, 0.0)
    # TODO(synk): dropout with p>0 (training mode) needs pltpu.prng_* masking; p=0 is identity.

    y = jnp.dot(hn.astype(mm_dtype), w2_ref[...],
                preferred_element_type=jnp.float32) + b2_ref[...]
    out_ref[...] = y.astype(out_ref.dtype)


# ---------------------------------------------------------------------------
# Wrapper
# ---------------------------------------------------------------------------
def base_encoder_forward(x, batch, params, num_graphs, *,
                         use_bf16_matmul=True, tile_n=None,
                         out_dtype=jnp.float32):
    """x: [N, C_in] f32, batch: [N] int32 graph ids in [0, num_graphs)."""
    N, C_in = x.shape
    C_out = params["w1"].shape[0]
    G = int(num_graphs)

    C_pad = _round_up(C_out, 128)                     # lane-dense channels
    vmem_cap = _vmem_capacity_bytes()
    tile_n = tile_n or _choose_tile_n(N, C_in, C_pad, vmem_cap)

    # 2 core-parallel chunks for the stats pass when there are >=2 tiles
    # (doubles Pass A throughput on v7x; neutral on single-TC v5e/v6e).
    n_chunks = 2 if pl.cdiv(N, tile_n) >= 2 else 1
    N_pad = _round_up(N, tile_n * n_chunks)
    num_tiles = N_pad // tile_n
    tiles_per_chunk = num_tiles // n_chunks

    mm_dtype = jnp.bfloat16 if use_bf16_matmul else jnp.float32

    # ---- glue: only pad x when actually required; batch pad is tiny ----
    if N_pad != N or x.dtype != jnp.float32:
        x_p = jnp.zeros((N_pad, C_in), jnp.float32).at[:N].set(x.astype(jnp.float32))
    else:
        x_p = x
    batch_p = jnp.full((N_pad,), G, jnp.int32).at[:N].set(batch.astype(jnp.int32))
    batch_row = batch_p.reshape(1, N_pad)
    batch_col = batch_p.reshape(N_pad, 1)

    def pad_mat(w_t, rows, cols):
        out = jnp.zeros((rows, cols), jnp.float32)
        return out.at[:w_t.shape[0], :w_t.shape[1]].set(w_t)

    def pad_row(v):
        return jnp.zeros((1, C_pad), jnp.float32).at[0, :v.shape[0]].set(v)

    w1_p = pad_mat(params["w1"].T, C_in, C_pad).astype(mm_dtype)    # [C_in, C_pad]
    w2_p = pad_mat(params["w2"].T, C_pad, C_pad).astype(mm_dtype)   # [C_pad, C_pad]
    b1_p = pad_row(params["b1"])
    b2_p = pad_row(params["b2"])

    vmem = _vmem_limit_bytes(tile_n, C_in, C_pad, G, vmem_cap)

    # ------------------------- Pass A: stats -------------------------
    part_h, part_hh = pl.pallas_call(
        functools.partial(_stats_kernel, mm_dtype),
        out_shape=(jax.ShapeDtypeStruct((n_chunks, G, C_pad), jnp.float32),
                   jax.ShapeDtypeStruct((n_chunks, G, C_pad), jnp.float32)),
        grid=(n_chunks, tiles_per_chunk),
        in_specs=[
            pl.BlockSpec((1, tile_n),
                         lambda c, i: (0, c * tiles_per_chunk + i)),    # batch row
            pl.BlockSpec((tile_n, C_in),
                         lambda c, i: (c * tiles_per_chunk + i, 0)),    # x
            pl.BlockSpec((C_in, C_pad), lambda c, i: (0, 0)),           # W1^T (resident)
            pl.BlockSpec((1, C_pad), lambda c, i: (0, 0)),              # b1
        ],
        out_specs=(
            pl.BlockSpec((None, G, C_pad), lambda c, i: (c, 0, 0)),     # sum(h) / chunk
            pl.BlockSpec((None, G, C_pad), lambda c, i: (c, 0, 0)),     # sum(h^2) / chunk
        ),
        compiler_params=pltpu.CompilerParams(
            dimension_semantics=("parallel", "arbitrary"),
            vmem_limit_bytes=vmem),
    )(batch_row, x_p, w1_p, b1_p)

    # -------------- finalize GraphNorm fold (tiny O(G*C) JAX) --------------
    counts = jnp.zeros((G,), jnp.float32).at[batch.astype(jnp.int32)].add(1.0)
    inv_cnt = (1.0 / jnp.maximum(counts, 1.0))[:, None]                 # [G, 1]
    mean = part_h.sum(axis=0) * inv_cnt                                 # E[h]
    ex2 = part_hh.sum(axis=0) * inv_cnt                                 # E[h^2]
    gn_w = pad_row(params["gn_weight"])   # padded channels -> weight 0 -> inert
    gn_b = pad_row(params["gn_bias"])
    gn_ms = pad_row(params["gn_mean_scale"])
    # var of (h - ms*mean) = E[h^2] - (2*ms - ms^2)*mean^2  (all f32)
    var = jnp.maximum(ex2 - (2.0 * gn_ms - gn_ms * gn_ms) * mean * mean, 0.0)
    scale = gn_w * lax.rsqrt(var + EPS)                                 # [G, C_pad]
    shift = gn_b - gn_ms * mean * scale
    scale_shift = jnp.concatenate([scale, shift], axis=-1)              # [G, 2*C_pad]

    # ----------------------- Pass B: normalize -----------------------
    use_select = G <= _SELECT_CHAIN_MAX_G
    y_full = pl.pallas_call(
        functools.partial(_norm_kernel, G, mm_dtype, use_select),
        out_shape=jax.ShapeDtypeStruct((N_pad, C_pad), out_dtype),
        grid=(num_tiles,),
        in_specs=[
            pl.BlockSpec((tile_n, 1), lambda i: (i, 0)),        # batch col
            pl.BlockSpec((tile_n, C_in), lambda i: (i, 0)),     # x (re-streamed)
            pl.BlockSpec((G, 2 * C_pad), lambda i: (0, 0)),     # [scale|shift]
            pl.BlockSpec((C_in, C_pad), lambda i: (0, 0)),      # W1^T
            pl.BlockSpec((1, C_pad), lambda i: (0, 0)),         # b1
            pl.BlockSpec((C_pad, C_pad), lambda i: (0, 0)),     # W2^T
            pl.BlockSpec((1, C_pad), lambda i: (0, 0)),         # b2
        ],
        out_specs=pl.BlockSpec((tile_n, C_pad), lambda i: (i, 0)),
        compiler_params=pltpu.CompilerParams(
            dimension_semantics=("parallel",),                  # independent tiles -> megacore
            vmem_limit_bytes=vmem),
    )(batch_col, x_p, scale_shift, w1_p, b1_p, w2_p, b2_p)

    return y_full[:N, :C_out]


# ---------------------------------------------------------------------------
# Pure-JAX reference mirroring the PyTorch semantics
# ---------------------------------------------------------------------------
def _reference_forward(x, batch, params, num_graphs):
    h = x @ params["w1"].T + params["b1"]
    seg_sum = jax.ops.segment_sum(h, batch, num_segments=num_graphs)
    counts = jnp.maximum(
        jax.ops.segment_sum(jnp.ones((x.shape[0],)), batch, num_segments=num_graphs), 1.0)
    mean = seg_sum / counts[:, None]
    out = h - mean[batch] * params["gn_mean_scale"]
    var = jax.ops.segment_sum(out * out, batch, num_segments=num_graphs) / counts[:, None]
    std = jnp.sqrt(var + EPS)
    h = params["gn_weight"] * out / std[batch] + params["gn_bias"]
    h = jnp.maximum(h, 0.0)
    return h @ params["w2"].T + params["b2"]


def init_params(key, in_channels, out_channels):
    k1, k2, k3, k4 = jax.random.split(key, 4)
    bound1 = 1.0 / jnp.sqrt(in_channels)
    bound2 = 1.0 / jnp.sqrt(out_channels)
    return {
        "w1": jax.random.uniform(k1, (out_channels, in_channels), jnp.float32,
                                 -bound1, bound1),
        "b1": jax.random.uniform(k2, (out_channels,), jnp.float32, -bound1, bound1),
        "w2": jax.random.uniform(k3, (out_channels, out_channels), jnp.float32,
                                 -bound2, bound2),
        "b2": jax.random.uniform(k4, (out_channels,), jnp.float32, -bound2, bound2),
        # GraphNorm defaults: weight=1, bias=0, mean_scale=1
        "gn_weight": jnp.ones((out_channels,), jnp.float32),
        "gn_bias": jnp.zeros((out_channels,), jnp.float32),
        "gn_mean_scale": jnp.ones((out_channels,), jnp.float32),
    }


if __name__ == "__main__":
    key = jax.random.PRNGKey(0)
    kx, kp = jax.random.split(key)

    N, in_channels, out_channels, num_graphs = 16, 8, 32, 2
    x = jax.random.normal(kx, (N, in_channels), jnp.float32)
    # batch vector: first 7 nodes -> graph 0, remaining 9 -> graph 1
    batch = jnp.concatenate([jnp.zeros((7,), jnp.int32), jnp.ones((9,), jnp.int32)])

    params = init_params(kp, in_channels, out_channels)
    y_ref = _reference_forward(x, batch, params, num_graphs)

    # Exact f32 path: tight check against reference.
    y_f32 = base_encoder_forward(x, batch, params, num_graphs, use_bf16_matmul=False)
    y_f32 = jax.block_until_ready(y_f32)
    assert y_f32.shape == (N, out_channels)
    assert jnp.allclose(y_f32, y_ref, atol=1e-4, rtol=1e-4), "f32 mismatch vs JAX reference"

    # bf16-MXU path (default for v6e/v7x throughput): loose check.
    y_bf16 = base_encoder_forward(x, batch, params, num_graphs, use_bf16_matmul=True)
    y_bf16 = jax.block_until_ready(y_bf16)
    assert y_bf16.shape == (N, out_channels)
    assert jnp.allclose(y_bf16, y_ref, atol=5e-2, rtol=5e-2), "bf16 mismatch vs JAX reference"

    print("KERNEL_OK")
</pallas_src>

<mosaic_0001>
module attributes {stable_mosaic.version = 11 : i64} {
  func.func @_stats_kernel(%arg0: i32, %arg1: i32, %arg2: memref<1x16xi32, #tpu.memory_space<vmem>>, %arg3: memref<16x8xf32, #tpu.memory_space<vmem>>, %arg4: memref<8x128xf32, #tpu.memory_space<vmem>>, %arg5: memref<1x128xf32, #tpu.memory_space<vmem>>, %arg6: memref<1x2x128xf32, #tpu.memory_space<vmem>>, %arg7: memref<1x2x128xf32, #tpu.memory_space<vmem>>) attributes {dimension_semantics = [#tpu.dimension_semantics<parallel>, #tpu.dimension_semantics<arbitrary>], iteration_bounds = array<i64: 1, 1>, scalar_prefetch = 0 : i64, scratch_operands = 0 : i64, tpu.core_type = #tpu.core_type<tc>, window_params = [{transform_indices = @transform_0, window_bounds = array<i64: 1, 16>}, {transform_indices = @transform_1, window_bounds = array<i64: 16, 8>}, {pipeline_mode = #tpu.pipeline_mode<synchronous>, transform_indices = @transform_2, window_bounds = array<i64: 8, 128>}, {pipeline_mode = #tpu.pipeline_mode<synchronous>, transform_indices = @transform_3, window_bounds = array<i64: 1, 128>}, {transform_indices = @transform_4, window_bounds = array<i64: 1, 2, 128>}, {transform_indices = @transform_5, window_bounds = array<i64: 1, 2, 128>}]} {
    %c0_i32 = arith.constant 0 : i32
    %0 = arith.cmpi eq, %arg1, %c0_i32 : i32
    %1 = arith.extui %0 : i1 to i32
    %c0_i32_0 = arith.constant 0 : i32
    %2 = arith.cmpi ne, %1, %c0_i32_0 : i32
    scf.if %2 {
      %cst_22 = arith.constant 0.000000e+00 : f32
      %30 = vector.broadcast %cst_22 : f32 to vector<2x128xf32>
      %c0_23 = arith.constant 0 : index
      %c0_24 = arith.constant 0 : index
      %c0_25 = arith.constant 0 : index
      %31 = vector.load %arg6[%c0_23, %c0_24, %c0_25] : memref<1x2x128xf32, #tpu.memory_space<vmem>>, vector<1x2x128xf32>
      %32 = vector.shape_cast %31 : vector<1x2x128xf32> to vector<2x128xf32>
      %33 = vector.shape_cast %30 : vector<2x128xf32> to vector<1x2x128xf32>
      tpu.vector_store %arg6[%c0_23, %c0_24, %c0_25], %33 {strides = array<i32>} : memref<1x2x128xf32, #tpu.memory_space<vmem>>, vector<1x2x128xf32>,
      %cst_26 = arith.constant 0.000000e+00 : f32
      %34 = vector.broadcast %cst_26 : f32 to vector<2x128xf32>
      %c0_27 = arith.constant 0 : index
      %c0_28 = arith.constant 0 : index
      %c0_29 = arith.constant 0 : index
      %35 = vector.load %arg7[%c0_27, %c0_28, %c0_29] : memref<1x2x128xf32, #tpu.memory_space<vmem>>, vector<1x2x128xf32>
      %36 = vector.shape_cast %35 : vector<1x2x128xf32> to vector<2x128xf32>
      %37 = vector.shape_cast %34 : vector<2x128xf32> to vector<1x2x128xf32>
      tpu.vector_store %arg7[%c0_27, %c0_28, %c0_29], %37 {strides = array<i32>} : memref<1x2x128xf32, #tpu.memory_space<vmem>>, vector<1x2x128xf32>,
    } else {
    }
    %c0 = arith.constant 0 : index
    %c0_1 = arith.constant 0 : index
    %3 = vector.load %arg3[%c0, %c0_1] : memref<16x8xf32, #tpu.memory_space<vmem>>, vector<16x8xf32>
    %c0_2 = arith.constant 0 : index
    %c0_3 = arith.constant 0 : index
    %4 = vector.load %arg4[%c0_2, %c0_3] : memref<8x128xf32, #tpu.memory_space<vmem>>, vector<8x128xf32>
    %cst = arith.constant dense<0.000000e+00> : vector<16x128xf32>
    %5 = tpu.matmul %3, %4, %cst {dimension_numbers = #tpu.dot_dimension_numbers<[1], [0], [0], [1], [0, 0, 1, 1], [], []>} : vector<16x8xf32>, vector<8x128xf32>, vector<16x128xf32> -> vector<16x128xf32>
    %c0_4 = arith.constant 0 : index
    %c0_5 = arith.constant 0 : index
    %6 = vector.load %arg5[%c0_4, %c0_5] : memref<1x128xf32, #tpu.memory_space<vmem>>, vector<1x128xf32>
    %7 = vector.broadcast %6 : vector<1x128xf32> to vector<16x128xf32>
    %8 = arith.addf %5, %7 : vector<16x128xf32>
    %c0_6 = arith.constant 0 : index
    %c0_7 = arith.constant 0 : index
    %9 = vector.load %arg2[%c0_6, %c0_7] : memref<1x16xi32, #tpu.memory_space<vmem>>, vector<1x16xi32>
    %10 = tpu.iota {dimensions = array<i32: 0>} : vector<2x16xi32>
    %11 = vector.broadcast %9 : vector<1x16xi32> to vector<2x16xi32>
    %12 = arith.cmpi eq, %10, %11 : vector<2x16xi32>
    %13 = arith.extui %12 : vector<2x16xi1> to vector<2x16xi32>
    %14 = arith.sitofp %13 : vector<2x16xi32> to vector<2x16xf32>
    %c0_8 = arith.constant 0 : index
    %c0_9 = arith.constant 0 : index
    %c0_10 = arith.constant 0 : index
    %15 = vector.load %arg6[%c0_8, %c0_9, %c0_10] : memref<1x2x128xf32, #tpu.memory_space<vmem>>, vector<1x2x128xf32>
    %16 = vector.shape_cast %15 : vector<1x2x128xf32> to vector<2x128xf32>
    %cst_11 = arith.constant dense<0.000000e+00> : vector<2x128xf32>
    %17 = tpu.matmul %14, %8, %cst_11 {dimension_numbers = #tpu.dot_dimension_numbers<[1], [0], [0], [1], [0, 0, 1, 1], [], []>} : vector<2x16xf32>, vector<16x128xf32>, vector<2x128xf32> -> vector<2x128xf32>
    %18 = arith.addf %16, %17 : vector<2x128xf32>
    %c0_12 = arith.constant 0 : index
    %c0_13 = arith.constant 0 : index
    %c0_14 = arith.constant 0 : index
    %19 = vector.load %arg6[%c0_12, %c0_13, %c0_14] : memref<1x2x128xf32, #tpu.memory_space<vmem>>, vector<1x2x128xf32>
    %20 = vector.shape_cast %19 : vector<1x2x128xf32> to vector<2x128xf32>
    %21 = vector.shape_cast %18 : vector<2x128xf32> to vector<1x2x128xf32>
    tpu.vector_store %arg6[%c0_12, %c0_13, %c0_14], %21 {strides = array<i32>} : memref<1x2x128xf32, #tpu.memory_space<vmem>>, vector<1x2x128xf32>,
    %c0_15 = arith.constant 0 : index
    %c0_16 = arith.constant 0 : index
    %c0_17 = arith.constant 0 : index
    %22 = vector.load %arg7[%c0_15, %c0_16, %c0_17] : memref<1x2x128xf32, #tpu.memory_space<vmem>>, vector<1x2x128xf32>
    %23 = vector.shape_cast %22 : vector<1x2x128xf32> to vector<2x128xf32>
    %24 = arith.mulf %8, %8 : vector<16x128xf32>
    %cst_18 = arith.constant dense<0.000000e+00> : vector<2x128xf32>
    %25 = tpu.matmul %14, %24, %cst_18 {dimension_numbers = #tpu.dot_dimension_numbers<[1], [0], [0], [1], [0, 0, 1, 1], [], []>} : vector<2x16xf32>, vector<16x128xf32>, vector<2x128xf32> -> vector<2x128xf32>
    %26 = arith.addf %23, %25 : vector<2x128xf32>
    %c0_19 = arith.constant 0 : index
    %c0_20 = arith.constant 0 : index
    %c0_21 = arith.constant 0 : index
    %27 = vector.load %arg7[%c0_19, %c0_20, %c0_21] : memref<1x2x128xf32, #tpu.memory_space<vmem>>, vector<1x2x128xf32>
    %28 = vector.shape_cast %27 : vector<1x2x128xf32> to vector<2x128xf32>
    %29 = vector.shape_cast %26 : vector<2x128xf32> to vector<1x2x128xf32>
    tpu.vector_store %arg7[%c0_19, %c0_20, %c0_21], %29 {strides = array<i32>} : memref<1x2x128xf32, #tpu.memory_space<vmem>>, vector<1x2x128xf32>,
    return
  }
  func.func @transform_0(%arg0: i32, %arg1: i32) -> (i32, i32) {
    %c1_i32 = arith.constant 1 : i32
    %0 = arith.muli %arg0, %c1_i32 : i32
    %1 = arith.addi %0, %arg1 : i32
    %c0_i32 = arith.constant 0 : i32
    %c0_i32_0 = arith.constant 0 : i32
    return %c0_i32, %1 : i32, i32
  }
  func.func @transform_1(%arg0: i32, %arg1: i32) -> (i32, i32) {
    %c1_i32 = arith.constant 1 : i32
    %0 = arith.muli %arg0, %c1_i32 : i32
    %1 = arith.addi %0, %arg1 : i32
    %c0_i32 = arith.constant 0 : i32
    %c0_i32_0 = arith.constant 0 : i32
    return %1, %c0_i32 : i32, i32
  }
  func.func @transform_2(%arg0: i32, %arg1: i32) -> (i32, i32) {
    %c0_i32 = arith.constant 0 : i32
    %c0_i32_0 = arith.constant 0 : i32
    %c0_i32_1 = arith.constant 0 : i32
    return %c0_i32, %c0_i32_0 : i32, i32
  }
  func.func @transform_3(%arg0: i32, %arg1: i32) -> (i32, i32) {
    %c0_i32 = arith.constant 0 : i32
    %c0_i32_0 = arith.constant 0 : i32
    %c0_i32_1 = arith.constant 0 : i32
    return %c0_i32, %c0_i32_0 : i32, i32
  }
  func.func @transform_4(%arg0: i32, %arg1: i32) -> (i32, i32, i32) {
    %c0_i32 = arith.constant 0 : i32
    %c0_i32_0 = arith.constant 0 : i32
    %c0_i32_1 = arith.constant 0 : i32
    return %arg0, %c0_i32, %c0_i32_0 : i32, i32, i32
  }
  func.func @transform_5(%arg0: i32, %arg1: i32) -> (i32, i32, i32) {
    %c0_i32 = arith.constant 0 : i32
    %c0_i32_0 = arith.constant 0 : i32
    %c0_i32_1 = arith.constant 0 : i32
    return %arg0, %c0_i32, %c0_i32_0 : i32, i32, i32
  }
}

</mosaic_0001>

<llo_original>
// kernel: tpu_custom_call.1
$region0: #{tpu_custom_call.1}
  #allocation0 [shape = 'u32[]', space=smem, size = 0x4, offset = 0x4, fixed_abs, tag = 'smem constant byte address 0x4 - core index']
  #allocation1 [shape = 'u32[72,128]{1,0:T(1,128)}', space=vmem, size = 0x9000, scoped, tag = 'internal scratch']
  %s0 = inlined_call_operand.vmem [shape: s32[1,16], index: 0, kind: input, shape index: {}]
  %s1 = inlined_call_operand.vmem [shape: f32[16,8], index: 1, kind: input, shape index: {}]
  %s2 = inlined_call_operand.vmem [shape: f32[8,128], index: 2, kind: input, shape index: {}]
  %s3 = inlined_call_operand.vmem [shape: f32[1,128], index: 3, kind: input, shape index: {}]
  %s4 = inlined_call_operand.hbm [shape: f32[1,2,128], index: 4, kind: output, shape index: {0}]
  %s5 = inlined_call_operand.hbm [shape: f32[1,2,128], index: 5, kind: output, shape index: {1}]
  %6 = xla_tuple %s4, %s5
  %s7 = sld [smem:[#allocation0]]
  $region38: #{tpu_custom_call.1} parent=0
    _
  %s9 = ssub.s32 1, %s7
  %s10 = scalar_select 0, %s9, %s7
  $region1: #{tpu_custom_call.1} parent=0
    #allocation2 [shape = 'u8[1024]{0}', space=vmem, size = 0x400, scoped, tag = 'output window, operand 0, single buffered']
    #allocation3 [shape = 's32[1]{0}', space=sflag, size = 0x4, scoped, tag = 'scoped memory for tpu_custom_call.1']
    #allocation4 [shape = 'u8[1024]{0}', space=vmem, size = 0x400, scoped, tag = 'output window, operand 1, single buffered']
    #allocation5 [shape = 's32[1]{0}', space=sflag, size = 0x4, scoped, tag = 'scoped memory for tpu_custom_call.1']
    %11 = vsyncpa [#allocation3], 0
    %12 = vsyncpa [#allocation5], 0
    // Predicated region
    $region2: #{tpu_custom_call.1} parent=1 // pred_check
      _
    $region3: #{tpu_custom_call.1} parent=1 // pred_check_branch
      %14 = sbr.rel (0) target = $region5
    $region4: #{tpu_custom_call.1} parent=1 // pred_region
      %s15 = sadd.s32 0, 0
      %p16 = scmp.lt.s32.totalorder %s15, 0
      %s17 = scalar_select %p16, %s15, 0
      %s18 = scalar_lea.vmem %s0, %s17
      %s19 = sadd.s32 0, 0
    $region5: #{tpu_custom_call.1} parent=1 // pred_fallthru
      _
    // Predicated region
    $region6: #{tpu_custom_call.1} parent=1 // pred_check
      _
    $region7: #{tpu_custom_call.1} parent=1 // pred_check_branch
      %21 = sbr.rel (0) target = $region9
    $region8: #{tpu_custom_call.1} parent=1 // pred_region
      %s22 = sadd.s32 0, 0
      %s23 = smul.u32 2, %s22
      %p24 = scmp.lt.s32.totalorder %s23, 1
      %s25 = scalar_select %p24, %s23, 1
      %s26 = smul.addr %s25, 8
      %s27 = scalar_lea.vmem %s1, %s26
      %s28 = sadd.s32 0, 0
      %s29 = smul.u32 2, %s28
    $region9: #{tpu_custom_call.1} parent=1 // pred_fallthru
      _
    // Predicated region
    $region10: #{tpu_custom_call.1} parent=1 // pred_check
      _
    $region11: #{tpu_custom_call.1} parent=1 // pred_check_branch
      %31 = sbr.rel (0) target = $region13
    $region12: #{tpu_custom_call.1} parent=1 // pred_region
      _
    $region13: #{tpu_custom_call.1} parent=1 // pred_fallthru
      _
    // Predicated region
    $region14: #{tpu_custom_call.1} parent=1 // pred_check
      _
    $region15: #{tpu_custom_call.1} parent=1 // pred_check_branch
      %33 = sbr.rel (0) target = $region17
    $region16: #{tpu_custom_call.1} parent=1 // pred_region
      _
    $region17: #{tpu_custom_call.1} parent=1 // pred_fallthru
      _
    %s34 = sadd.s32 0, 0
    %p35 = scmp.lt.s32.totalorder %s34, 0
    %s36 = scalar_select %p35, %s34, 0
    %s37 = scalar_lea.vmem %s0, %s36
    %s38 = sadd.s32 0, 0
    %s39 = smul.u32 2, %s38
    %p40 = scmp.lt.s32.totalorder %s39, 1
    %s41 = scalar_select %p40, %s39, 1
    %s42 = smul.addr %s41, 8
    %s43 = scalar_lea.vmem %s1, %s42
    %s44 = sadd.s32 0, 0
    %p45 = scmp.lt.s32.totalorder %s44, 0
    %s46 = scalar_select %p45, %s44, 0
    %s47 = scalar_lea.vmem %s0, %s46
    %s48 = sadd.s32 0, 0
    %s49 = sadd.s32 0, 0
    %s50 = smul.u32 2, %s49
    %p51 = scmp.lt.s32.totalorder %s50, 1
    %s52 = scalar_select %p51, %s50, 1
    %s53 = smul.addr %s52, 8
    %s54 = scalar_lea.vmem %s1, %s53
    %s55 = sadd.s32 0, 0
    %s56 = smul.u32 2, %s55
    %p57 = scmp.eq.s32.totalorder 0, 0
    // Predicated region
    $region18: #{tpu_custom_call.1} parent=1 // pred_check
      %p58 = pneg %p57
    $region19: #{tpu_custom_call.1} parent=1 // pred_check_branch
      %60 = sbr.rel (%p58) target = $region21
    $region20: #{tpu_custom_call.1} parent=1 // pred_region
      %61 = vst [vmem:[#allocation2] sm:$0x3] 0.0
      %62 = vst [vmem:[#allocation4] sm:$0x3] 0.0
    $region21: #{tpu_custom_call.1} parent=1 // pred_fallthru
      _
    %v63 = vld [vmem:[%s54] sm:$0xff]
    %v64 = vld [vmem:[%s54 + $0x8] sm:$0xff]
    %v65 = vld [vmem:[%s2] sm:$0xff]
    %v66 = vld [vmem:[%s3] sm:$0x1]
    %v68 = vperm.slane %v66, 0
    %vm70 = vcmask 64512
    %v72 = vsel %vm70, %v63, 0
    %v75 = vsel %vm70, %v64, 0
    %77 = vmatpush.msra.mxu0 0.0
    %78 = vmatpush.msra.mxu0 0.0
    %79 = vmatpush.msra.mxu0 0.0
    %80 = vmatpush.msra.mxu0 0.0
    %81 = vmatpush.msra.mxu0 0.0
    %82 = vmatpush.msra.mxu0 0.0
    %83 = vmatpush.msra.mxu0 0.0
    %84 = vmatpush.msra.mxu0 0.0
    %85 = vmatpush.msra.mxu0 0.0
    %86 = vmatpush.msra.mxu0 0.0
    %87 = vmatpush.msra.mxu0 0.0
    %88 = vmatpush.msra.mxu0 0.0
    %89 = vmatpush.msra.mxu0 0.0
    %90 = vmatpush.msra.mxu0 0.0
    %91 = vmatpush.msra.mxu0 0.0
    %92 = vmatpush.msra.mxu0 %v65
    %93 = vmatmul.f32.gmra.mxu0 %v72
    %v94 = vpop.f32.mrf.mxu0
    %v95 = vadd.f32 %v68, %v94
    %96 = vmatmul.f32.gmra.mxu0 %v75
    %v97 = vpop.f32.mrf.mxu0
    %v98 = vadd.f32 %v68, %v97
    %99 = vdwg.mxu0
    %v100 = vld [vmem:[%s47] sm:$0x1]
    %v101 = vlaneseq
    %v102 = vshrl.u32 %v101, 7
    %v103 = vperm.slane %v100, 0
    %vm104 = vcmp.eq.s32.totalorder %v102, %v103
    %v105 = vsel %vm104, 1, 0
    %v106 = vcvt.s32.f32 %v105
    %v107 = vld [vmem:[#allocation2] sm:$0x3]
    %vm108 = vcmask 130048
    %v110 = vsel %vm108, %v106, 0
    %112 = vmatpush.msra.mxu0 0.0
    %113 = vmatpush.msra.mxu0 0.0
    %114 = vmatpush.msra.mxu0 0.0
    %115 = vmatpush.msra.mxu0 0.0
    %116 = vmatpush.msra.mxu0 0.0
    %117 = vmatpush.msra.mxu0 0.0
    %118 = vmatpush.msra.mxu0 0.0
    %119 = vmatpush.msra.mxu0 0.0
    %120 = vmatpush.msra.mxu0 0.0
    %121 = vmatpush.msra.mxu0 0.0
    %122 = vmatpush.msra.mxu0 0.0
    %123 = vmatpush.msra.mxu0 0.0
    %124 = vmatpush.msra.mxu0 0.0
    %125 = vmatpush.msra.mxu0 0.0
    %126 = vmatpush.msra.mxu0 %v98
    %127 = vmatpush.msra.mxu0 %v95
    %128 = vmatmul.f32.gmra.mxu0 %v110
    %v129 = vpop.f32.mrf.mxu0
    %v130 = vadd.f32 0.0, %v129
    %131 = vdwg.mxu0
    %v132 = vadd.f32 %v107, %v130
    %133 = vst [vmem:[#allocation2] sm:$0x3] %v132
    %v134 = vld [vmem:[#allocation4] sm:$0x3]
    %v135 = vmul.f32 %v95, %v95
    %v136 = vmul.f32 %v98, %v98
    %137 = vmatpush.msra.mxu0 0.0
    %138 = vmatpush.msra.mxu0 0.0
    %139 = vmatpush.msra.mxu0 0.0
    %140 = vmatpush.msra.mxu0 0.0
    %141 = vmatpush.msra.mxu0 0.0
    %142 = vmatpush.msra.mxu0 0.0
    %143 = vmatpush.msra.mxu0 0.0
    %144 = vmatpush.msra.mxu0 0.0
    %145 = vmatpush.msra.mxu0 0.0
    %146 = vmatpush.msra.mxu0 0.0
    %147 = vmatpush.msra.mxu0 0.0
    %148 = vmatpush.msra.mxu0 0.0
    %149 = vmatpush.msra.mxu0 0.0
    %150 = vmatpush.msra.mxu0 0.0
    %151 = vmatpush.msra.mxu0 %v136
    %152 = vmatpush.msra.mxu0 %v135
    %153 = vmatmul.f32.gmra.mxu0 %v110
    %v154 = vpop.f32.mrf.mxu0
    %v155 = vadd.f32 0.0, %v154
    %156 = vdwg.mxu0
    %v157 = vadd.f32 %v134, %v155
    %158 = vst [vmem:[#allocation4] sm:$0x3] %v157
    // Predicated region
    $region22: #{tpu_custom_call.1} parent=1 // pred_check
      _
    $region23: #{tpu_custom_call.1} parent=1 // pred_check_branch
      %160 = sbr.rel (0) target = $region25
    $region24: #{tpu_custom_call.1} parent=1 // pred_region
      %162 = vsyncadd [#allocation3], 0
      %s164 = sshll.u32 [#allocation2], 4
      %s165 = int_to_ptr.vmem [resolvable:$true] %s164
      %s166 = sshll.u32 %s4, 4
      %s167 = int_to_ptr.hbm [resolvable:$true] %s166
      %169 = dma.vmem_to_hbm [thread:$0]  %s165, 32, %s167, [#allocation3]
    $region25: #{tpu_custom_call.1} parent=1 // pred_fallthru
      _
    // Predicated region
    $region26: #{tpu_custom_call.1} parent=1 // pred_check
      _
    $region27: #{tpu_custom_call.1} parent=1 // pred_check_branch
      %171 = sbr.rel (0) target = $region29
    $region28: #{tpu_custom_call.1} parent=1 // pred_region
      %173 = vsyncadd [#allocation5], 0
      %s175 = sshll.u32 [#allocation4], 4
      %s176 = int_to_ptr.vmem [resolvable:$true] %s175
      %s177 = sshll.u32 %s5, 4
      %s178 = int_to_ptr.hbm [resolvable:$true] %s177
      %180 = dma.vmem_to_hbm [thread:$0]  %s176, 32, %s178, [#allocation5]
    $region29: #{tpu_custom_call.1} parent=1 // pred_fallthru
      _
    // Predicated region
    $region30: #{tpu_custom_call.1} parent=1 // pred_check
      _
    $region31: #{tpu_custom_call.1} parent=1 // pred_check_branch
      %182 = sbr.rel (0) target = $region33
    $region32: #{tpu_custom_call.1} parent=1 // pred_region
      %184 = dma.done [#allocation3], 32
    $region33: #{tpu_custom_call.1} parent=1 // pred_fallthru
      _
    // Predicated region
    $region34: #{tpu_custom_call.1} parent=1 // pred_check
      _
    $region35: #{tpu_custom_call.1} parent=1 // pred_check_branch
      %186 = sbr.rel (0) target = $region37
    $region36: #{tpu_custom_call.1} parent=1 // pred_region
      %188 = dma.done [#allocation5], 32
    $region37: #{tpu_custom_call.1} parent=1 // pred_fallthru
      _
    %189 = vsyncpa [#allocation3], 1
    %190 = vsyncpa [#allocation5], 1

</llo_original>
